<compile_context>
chip_gen: v7x
topology: tpu7x:2x2x1
jax: 0.10.0
libtpu: 0.0.40
codegen_flags: <defaults>
</compile_context>

<pallas_src>
import functools

import jax
import jax.numpy as jnp
from jax.experimental import pallas as pl
from jax.experimental.pallas import tpu as pltpu


def _round_up(n: int, m: int) -> int:
    return ((n + m - 1) // m) * m


# --------------------------------------------------------------------------
# Kernels
# --------------------------------------------------------------------------
def _apply_head(logits, o_ref, target_size: int):
    """LogSoftmax (target_size > 1) or Sigmoid head; stores only real columns."""
    if target_size > 1:
        # Padded columns carry a -1e30 bias, so they perturb neither the max
        # nor the sum.
        m = jnp.max(logits, axis=-1, keepdims=True)
        lse = m + jnp.log(jnp.sum(jnp.exp(logits - m), axis=-1, keepdims=True))
        res = logits - lse
    else:
        # Sigmoid; reciprocal routed to the (otherwise idle) EUP slot.
        res = pl.reciprocal(1.0 + jnp.exp(-logits), approx=True)
    # Lane slice to the real head width -> unpadded (tb, target_size) store.
    o_ref[...] = res[:, :target_size].astype(o_ref.dtype)


def _fused_kernel(x_ref, w1_ref, b1_ref, w2_ref, b2_ref, o_ref,
                  *, target_size: int):
    """Faithful path: x -> linear_layer -> dense -> head."""
    x = x_ref[...].astype(jnp.bfloat16)                 # in-kernel cast
    h = jnp.dot(x, w1_ref[...], preferred_element_type=jnp.float32)
    h = (h + b1_ref[...]).astype(jnp.bfloat16)
    logits = jnp.dot(h, w2_ref[...], preferred_element_type=jnp.float32)
    logits = logits + b2_ref[...]
    _apply_head(logits, o_ref, target_size)


def _folded_kernel(x_ref, w_ref, b_ref, o_ref, *, target_size: int):
    """Folded path: x @ (W1 @ W2) + (b1 @ W2 + b2) -> head (single matmul)."""
    x = x_ref[...].astype(jnp.bfloat16)
    logits = jnp.dot(x, w_ref[...], preferred_element_type=jnp.float32)
    logits = logits + b_ref[...]
    _apply_head(logits, o_ref, target_size)


# --------------------------------------------------------------------------
# One-time parameter preparation (hoisted out of the forward path)
# --------------------------------------------------------------------------
def prepare_params(w1, b1, w2, b2, *, target_size: int, fold_layers: bool = False):
    """Precompute kernel-ready weights ONCE.

    w1: (in_dim, hidden), b1: (hidden,)/(1, hidden),
    w2: (hidden, target_size), b2: (target_size,)/(1, target_size).
    """
    ts = target_size
    out_pad = 128 * pl.cdiv(ts, 128)
    pad_bias = -1e30 if ts > 1 else 0.0
    b1_row = jnp.reshape(b1, (1, -1)).astype(jnp.float32)
    b2_row = jnp.reshape(b2, (1, -1)).astype(jnp.float32)

    if fold_layers:
        # No nonlinearity between the two Linears (only eval-mode Dropout), so
        # they compose exactly: W_eff = W1 @ W2, b_eff = b1 @ W2 + b2.
        w_eff = w1.astype(jnp.float32) @ w2.astype(jnp.float32)
        b_eff = b1_row @ w2.astype(jnp.float32) + b2_row
        w_pad = jnp.pad(w_eff.astype(jnp.bfloat16), ((0, 0), (0, out_pad - ts)))
        b_pad = jnp.pad(b_eff, ((0, 0), (0, out_pad - ts)),
                        constant_values=pad_bias)
        return (w_pad, b_pad)

    w1_bf = w1.astype(jnp.bfloat16)
    w2_pad = jnp.pad(w2.astype(jnp.bfloat16), ((0, 0), (0, out_pad - ts)))
    b2_pad = jnp.pad(b2_row, ((0, 0), (0, out_pad - ts)),
                     constant_values=pad_bias)
    return (w1_bf, b1_row, w2_pad, b2_pad)


# --------------------------------------------------------------------------
# Forward wrapper
# --------------------------------------------------------------------------
def linear_model_forward(x, params, *, target_size: int, block_batch: int = 512):
    """x: (batch, in_dim) f32; params from prepare_params()."""
    if x.dtype != jnp.float32:
        x = x.astype(jnp.float32)
    batch, in_dim = x.shape
    folded = len(params) == 2
    out_pad = params[-1].shape[1]
    hidden = None if folded else params[0].shape[1]

    # ---- batch tiling -----------------------------------------------------
    tb = min(block_batch, _round_up(batch, 8))
    # v7x megacore: guarantee >= 2 grid steps whenever the batch permits so
    # the "parallel" batch axis actually shards across both TensorCores.
    if batch >= 16 and pl.cdiv(batch, tb) < 2:
        tb = _round_up(pl.cdiv(batch, 2), 8)

    # ---- generation-aware VMEM budget; shrink tb instead of clipping -------
    try:
        vmem_cap = int(pltpu.get_tpu_info().vmem_capacity_bytes)
    except Exception:
        vmem_cap = 64 << 20                      # conservative (v7x per-TC)
    vmem_budget = int(vmem_cap * 0.85)

    def _req_bytes(tb_):
        req = 2 * tb_ * in_dim * 4 + 2 * tb_ * target_size * 4   # x / out tiles
        req += 2 * tb_ * out_pad * 4                             # logits temps
        if folded:
            req += 2 * (in_dim * out_pad * 2 + out_pad * 4)      # W_eff + b_eff
        else:
            req += 2 * (in_dim * hidden * 2 + hidden * 4)        # W1 + b1
            req += 2 * (hidden * out_pad * 2 + out_pad * 4)      # W2 + b2
            req += 2 * tb_ * hidden * 4                          # hidden act h
        return req

    while _req_bytes(tb) > vmem_budget and tb > 8:
        tb = max(8, _round_up(tb // 2, 8))

    grid = (pl.cdiv(batch, tb),)
    vmem_limit = int(min(vmem_budget, max(2 * _req_bytes(tb), 32 << 20)))

    # ---- cost estimate ------------------------------------------------------
    if folded:
        flops = 2 * batch * in_dim * out_pad
        bytes_accessed = (x.size * 4 + params[0].size * 2 + params[1].size * 4
                          + batch * target_size * 4)
        kernel = functools.partial(_folded_kernel, target_size=target_size)
        in_specs = [
            pl.BlockSpec((tb, in_dim), lambda i: (i, 0)),        # x      (tiled)
            pl.BlockSpec((in_dim, out_pad), lambda i: (0, 0)),   # W_eff  (resident)
            pl.BlockSpec((1, out_pad), lambda i: (0, 0)),        # b_eff  (resident)
        ]
    else:
        flops = 2 * batch * (in_dim * hidden + hidden * out_pad)
        bytes_accessed = (x.size * 4 + params[0].size * 2 + params[1].size * 4
                          + params[2].size * 2 + params[3].size * 4
                          + batch * target_size * 4)
        kernel = functools.partial(_fused_kernel, target_size=target_size)
        in_specs = [
            pl.BlockSpec((tb, in_dim), lambda i: (i, 0)),        # x   (tiled)
            pl.BlockSpec((in_dim, hidden), lambda i: (0, 0)),    # W1  (resident)
            pl.BlockSpec((1, hidden), lambda i: (0, 0)),         # b1  (resident)
            pl.BlockSpec((hidden, out_pad), lambda i: (0, 0)),   # W2  (resident)
            pl.BlockSpec((1, out_pad), lambda i: (0, 0)),        # b2  (resident)
        ]

    cost = pl.CostEstimate(flops=flops, transcendentals=batch * out_pad,
                           bytes_accessed=int(bytes_accessed))

    return pl.pallas_call(
        kernel,
        out_shape=jax.ShapeDtypeStruct((batch, target_size), jnp.float32),
        grid=grid,
        in_specs=in_specs,
        out_specs=pl.BlockSpec((tb, target_size), lambda i: (i, 0)),
        compiler_params=pltpu.CompilerParams(
            dimension_semantics=("parallel",),
            vmem_limit_bytes=vmem_limit,
        ),
        cost_estimate=cost,
    )(x, *params)


# --------------------------------------------------------------------------
# Test harness
# --------------------------------------------------------------------------
def init_params(key, in_dim, hidden_dim, target_size):
    """Deterministic synthetic parameters (uniform, roughly PyTorch-like scale)."""
    k1, k2, k3, k4 = jax.random.split(key, 4)
    s1 = 1.0 / jnp.sqrt(in_dim)
    s2 = 1.0 / jnp.sqrt(hidden_dim)
    w1 = jax.random.uniform(k1, (in_dim, hidden_dim), jnp.float32, -s1, s1)
    b1 = jax.random.uniform(k2, (1, hidden_dim), jnp.float32, -s1, s1)
    w2 = jax.random.uniform(k3, (hidden_dim, target_size), jnp.float32, -s2, s2)
    b2 = jax.random.uniform(k4, (1, target_size), jnp.float32, -s2, s2)
    return w1, b1, w2, b2


def reference_forward(x, w1, b1, w2, b2, target_size):
    """Pure-JAX reference mirroring the fused kernel's bf16 mixed precision."""
    xb = x.astype(jnp.bfloat16).astype(jnp.float32)
    w1b = w1.astype(jnp.bfloat16).astype(jnp.float32)
    w2b = w2.astype(jnp.bfloat16).astype(jnp.float32)
    h = xb @ w1b + jnp.reshape(b1, (1, -1))
    h = h.astype(jnp.bfloat16).astype(jnp.float32)
    logits = h @ w2b + jnp.reshape(b2, (1, -1))
    if target_size > 1:
        return jax.nn.log_softmax(logits, axis=-1)
    return jax.nn.sigmoid(logits)


def reference_forward_folded(x, w1, b1, w2, b2, target_size):
    """Pure-JAX reference mirroring the folded kernel's precision."""
    w_eff = w1.astype(jnp.float32) @ w2.astype(jnp.float32)
    b_eff = (jnp.reshape(b1, (1, -1)).astype(jnp.float32) @ w2.astype(jnp.float32)
             + jnp.reshape(b2, (1, -1)).astype(jnp.float32))
    xb = x.astype(jnp.bfloat16).astype(jnp.float32)
    wb = w_eff.astype(jnp.bfloat16).astype(jnp.float32)
    logits = xb @ wb + b_eff
    if target_size > 1:
        return jax.nn.log_softmax(logits, axis=-1)
    return jax.nn.sigmoid(logits)


if __name__ == "__main__":
    key = jax.random.PRNGKey(0)
    kx1, kx2, kp1, kp2 = jax.random.split(key, 4)

    in_dim = 32
    hidden_dim = 64    # small stand-in for the default 2048

    # Case 1: target_size = 1 -> Sigmoid head (BINARY); single grid step.
    ts1 = 1
    batch1 = 8
    x1 = jax.random.normal(kx1, (batch1, in_dim), jnp.float32)
    w1, b1, w2, b2 = init_params(kp1, in_dim, hidden_dim, ts1)
    params1 = prepare_params(w1, b1, w2, b2, target_size=ts1)   # hoisted, one-time
    out1 = linear_model_forward(x1, params1, target_size=ts1)
    jax.block_until_ready(out1)
    ref1 = reference_forward(x1, w1, b1, w2, b2, ts1)
    assert out1.shape == (batch1, ts1)
    assert jnp.allclose(out1, ref1, atol=5e-3, rtol=5e-3), (
        float(jnp.max(jnp.abs(out1 - ref1))))

    # Case 2: target_size = 5 -> LogSoftmax head (GRADE); 2 grid steps.
    ts2 = 5
    batch2 = 16
    x2 = jax.random.normal(kx2, (batch2, in_dim), jnp.float32)
    w1, b1, w2, b2 = init_params(kp2, in_dim, hidden_dim, ts2)
    params2 = prepare_params(w1, b1, w2, b2, target_size=ts2)
    out2 = linear_model_forward(x2, params2, target_size=ts2)
    jax.block_until_ready(out2)
    ref2 = reference_forward(x2, w1, b1, w2, b2, ts2)
    assert out2.shape == (batch2, ts2)
    assert jnp.allclose(out2, ref2, atol=5e-3, rtol=5e-3), (
        float(jnp.max(jnp.abs(out2 - ref2))))

    # Case 3: folded fast path (no nonlinearity between the two Linears).
    params2f = prepare_params(w1, b1, w2, b2, target_size=ts2, fold_layers=True)
    out2f = linear_model_forward(x2, params2f, target_size=ts2)
    jax.block_until_ready(out2f)
    ref2f = reference_forward_folded(x2, w1, b1, w2, b2, ts2)
    assert out2f.shape == (batch2, ts2)
    assert jnp.allclose(out2f, ref2f, atol=5e-3, rtol=5e-3), (
        float(jnp.max(jnp.abs(out2f - ref2f))))

    print("KERNEL_OK")
</pallas_src>

<mosaic_0001>
module attributes {stable_mosaic.version = 11 : i64} {
  func.func @_fused_kernel(%arg0: i32, %arg1: memref<8x32xf32, #tpu.memory_space<vmem>>, %arg2: memref<32x64xbf16, #tpu.memory_space<vmem>>, %arg3: memref<1x64xf32, #tpu.memory_space<vmem>>, %arg4: memref<64x128xbf16, #tpu.memory_space<vmem>>, %arg5: memref<1x128xf32, #tpu.memory_space<vmem>>, %arg6: memref<8x1xf32, #tpu.memory_space<vmem>>) attributes {dimension_semantics = [#tpu.dimension_semantics<parallel>], iteration_bounds = array<i64: 1>, scalar_prefetch = 0 : i64, scratch_operands = 0 : i64, tpu.core_type = #tpu.core_type<tc>, window_params = [{transform_indices = @transform_0, window_bounds = array<i64: 8, 32>}, {pipeline_mode = #tpu.pipeline_mode<synchronous>, transform_indices = @transform_1, window_bounds = array<i64: 32, 64>}, {pipeline_mode = #tpu.pipeline_mode<synchronous>, transform_indices = @transform_2, window_bounds = array<i64: 1, 64>}, {pipeline_mode = #tpu.pipeline_mode<synchronous>, transform_indices = @transform_3, window_bounds = array<i64: 64, 128>}, {pipeline_mode = #tpu.pipeline_mode<synchronous>, transform_indices = @transform_4, window_bounds = array<i64: 1, 128>}, {transform_indices = @transform_5, window_bounds = array<i64: 8, 1>}]} {
    %c0 = arith.constant 0 : index
    %c0_0 = arith.constant 0 : index
    %0 = vector.load %arg1[%c0, %c0_0] : memref<8x32xf32, #tpu.memory_space<vmem>>, vector<8x32xf32>
    %1 = arith.truncf %0 : vector<8x32xf32> to vector<8x32xbf16>
    %c0_1 = arith.constant 0 : index
    %c0_2 = arith.constant 0 : index
    %2 = vector.load %arg2[%c0_1, %c0_2] : memref<32x64xbf16, #tpu.memory_space<vmem>>, vector<32x64xbf16>
    %cst = arith.constant dense<0.000000e+00> : vector<8x64xf32>
    %3 = tpu.matmul %1, %2, %cst {dimension_numbers = #tpu.dot_dimension_numbers<[1], [0], [0], [1], [0, 0, 1, 1], [], []>} : vector<8x32xbf16>, vector<32x64xbf16>, vector<8x64xf32> -> vector<8x64xf32>
    %c0_3 = arith.constant 0 : index
    %c0_4 = arith.constant 0 : index
    %4 = vector.load %arg3[%c0_3, %c0_4] : memref<1x64xf32, #tpu.memory_space<vmem>>, vector<1x64xf32>
    %5 = vector.broadcast %4 : vector<1x64xf32> to vector<8x64xf32>
    %6 = arith.addf %3, %5 : vector<8x64xf32>
    %7 = arith.truncf %6 : vector<8x64xf32> to vector<8x64xbf16>
    %c0_5 = arith.constant 0 : index
    %c0_6 = arith.constant 0 : index
    %8 = vector.load %arg4[%c0_5, %c0_6] : memref<64x128xbf16, #tpu.memory_space<vmem>>, vector<64x128xbf16>
    %cst_7 = arith.constant dense<0.000000e+00> : vector<8x128xf32>
    %9 = tpu.matmul %7, %8, %cst_7 {dimension_numbers = #tpu.dot_dimension_numbers<[1], [0], [0], [1], [0, 0, 1, 1], [], []>} : vector<8x64xbf16>, vector<64x128xbf16>, vector<8x128xf32> -> vector<8x128xf32>
    %c0_8 = arith.constant 0 : index
    %c0_9 = arith.constant 0 : index
    %10 = vector.load %arg5[%c0_8, %c0_9] : memref<1x128xf32, #tpu.memory_space<vmem>>, vector<1x128xf32>
    %11 = vector.broadcast %10 : vector<1x128xf32> to vector<8x128xf32>
    %12 = arith.addf %9, %11 : vector<8x128xf32>
    %cst_10 = arith.constant 0.000000e+00 : f32
    %13 = vector.broadcast %cst_10 : f32 to vector<8x128xf32>
    %14 = arith.subf %13, %12 : vector<8x128xf32>
    %15 = math.exp %14 : vector<8x128xf32>
    %cst_11 = arith.constant 1.000000e+00 : f32
    %16 = vector.broadcast %cst_11 : f32 to vector<8x128xf32>
    %17 = arith.addf %16, %15 : vector<8x128xf32>
    %18 = tpu.reciprocal %17 {approx = true} : vector<8x128xf32> -> vector<8x128xf32>
    %19 = vector.extract_strided_slice %18 {offsets = [0, 0], sizes = [8, 1], strides = [1, 1]} : vector<8x128xf32> to vector<8x1xf32>
    %c0_12 = arith.constant 0 : index
    %c0_13 = arith.constant 0 : index
    %20 = vector.load %arg6[%c0_12, %c0_13] : memref<8x1xf32, #tpu.memory_space<vmem>>, vector<8x1xf32>
    tpu.vector_store %arg6[%c0_12, %c0_13], %19 {strides = array<i32>} : memref<8x1xf32, #tpu.memory_space<vmem>>, vector<8x1xf32>,
    return
  }
  func.func @transform_0(%arg0: i32) -> (i32, i32) {
    %c0_i32 = arith.constant 0 : i32
    %c0_i32_0 = arith.constant 0 : i32
    return %arg0, %c0_i32 : i32, i32
  }
  func.func @transform_1(%arg0: i32) -> (i32, i32) {
    %c0_i32 = arith.constant 0 : i32
    %c0_i32_0 = arith.constant 0 : i32
    %c0_i32_1 = arith.constant 0 : i32
    return %c0_i32, %c0_i32_0 : i32, i32
  }
  func.func @transform_2(%arg0: i32) -> (i32, i32) {
    %c0_i32 = arith.constant 0 : i32
    %c0_i32_0 = arith.constant 0 : i32
    %c0_i32_1 = arith.constant 0 : i32
    return %c0_i32, %c0_i32_0 : i32, i32
  }
  func.func @transform_3(%arg0: i32) -> (i32, i32) {
    %c0_i32 = arith.constant 0 : i32
    %c0_i32_0 = arith.constant 0 : i32
    %c0_i32_1 = arith.constant 0 : i32
    return %c0_i32, %c0_i32_0 : i32, i32
  }
  func.func @transform_4(%arg0: i32) -> (i32, i32) {
    %c0_i32 = arith.constant 0 : i32
    %c0_i32_0 = arith.constant 0 : i32
    %c0_i32_1 = arith.constant 0 : i32
    return %c0_i32, %c0_i32_0 : i32, i32
  }
  func.func @transform_5(%arg0: i32) -> (i32, i32) {
    %c0_i32 = arith.constant 0 : i32
    %c0_i32_0 = arith.constant 0 : i32
    return %arg0, %c0_i32 : i32, i32
  }
}

</mosaic_0001>

<llo_original>
// kernel: tpu_custom_call.1
$region0: #{tpu_custom_call.1}
  #allocation0 [shape = 'u32[]', space=smem, size = 0x4, offset = 0x4, fixed_abs, tag = 'smem constant byte address 0x4 - core index']
  #allocation1 [shape = 'u32[144,128]{1,0:T(1,128)}', space=vmem, size = 0x12000, scoped, tag = 'internal scratch']
  %s0 = inlined_call_operand.hbm [shape: f32[8,32], index: 0, kind: input, shape index: {}]
  %s1 = inlined_call_operand.hbm [shape: bf16[32,64], index: 1, kind: input, shape index: {}]
  %s2 = inlined_call_operand.vmem [shape: f32[1,64], index: 2, kind: input, shape index: {}]
  %s3 = inlined_call_operand.hbm [shape: bf16[64,128], index: 3, kind: input, shape index: {}]
  %s4 = inlined_call_operand.vmem [shape: f32[1,128], index: 4, kind: input, shape index: {}]
  %s5 = inlined_call_operand.vmem [shape: f32[8,1], index: 5, kind: output, shape index: {}]
  %s6 = sld [smem:[#allocation0]]
  $region42: #{tpu_custom_call.1} parent=0
    _
  %s8 = ssub.s32 1, %s6
  %s9 = scalar_select 0, %s8, %s6
  $region1: #{tpu_custom_call.1} parent=0
    #allocation2 [shape = 'u8[4096]{0}', space=vmem, size = 0x1000, scoped, tag = 'input window, operand 0, single buffered']
    #allocation3 [shape = 's32[1]{0}', space=sflag, size = 0x4, scoped, tag = 'scoped memory for tpu_custom_call.1']
    #allocation4 [shape = 'u8[8192]{0}', space=vmem, size = 0x2000, scoped, tag = 'input window, operand 1, single buffered']
    #allocation5 [shape = 's32[1]{0}', space=sflag, size = 0x4, scoped, tag = 'scoped memory for tpu_custom_call.1']
    #allocation6 [shape = 'u8[16384]{0}', space=vmem, size = 0x4000, scoped, tag = 'input window, operand 3, single buffered']
    %10 = vsyncpa [#allocation3], 0
    %11 = vsyncpa [#allocation5], 0
    // Predicated region
    $region2: #{tpu_custom_call.1} parent=1 // pred_check
      _
    $region3: #{tpu_custom_call.1} parent=1 // pred_check_branch
      %13 = sbr.rel (0) target = $region5
    $region4: #{tpu_custom_call.1} parent=1 // pred_region
      %s15 = ssub.s32 128, 128
      %16 = vsyncadd [#allocation3], %s15
      %s18 = sshll.u32 [#allocation2], 4
      %s19 = int_to_ptr.vmem [resolvable:$true] %s18
      %21 = dma.hbm_to_vmem [thread:$0]  %s0, 128, %s19, [#allocation3]
    $region5: #{tpu_custom_call.1} parent=1 // pred_fallthru
      _
    // Predicated region
    $region6: #{tpu_custom_call.1} parent=1 // pred_check
      _
    $region7: #{tpu_custom_call.1} parent=1 // pred_check_branch
      %23 = sbr.rel (0) target = $region9
    $region8: #{tpu_custom_call.1} parent=1 // pred_region
      %s25 = ssub.s32 256, 256
      %26 = vsyncadd [#allocation5], %s25
      %s27 = sshll.u32 [#allocation4], 4
      %s28 = int_to_ptr.vmem [resolvable:$true] %s27
      %33 = dma.hbm_to_vmem [thread:$0]  %s1, 256, %s28, [#allocation5], 64, 64, 4
    $region9: #{tpu_custom_call.1} parent=1 // pred_fallthru
      _
    // Predicated region
    $region10: #{tpu_custom_call.1} parent=1 // pred_check
      _
    $region11: #{tpu_custom_call.1} parent=1 // pred_check_branch
      %35 = sbr.rel (0) target = $region13
    $region12: #{tpu_custom_call.1} parent=1 // pred_region
      _
    $region13: #{tpu_custom_call.1} parent=1 // pred_fallthru
      _
    // Predicated region
    $region14: #{tpu_custom_call.1} parent=1 // pred_check
      _
    $region15: #{tpu_custom_call.1} parent=1 // pred_check_branch
      %37 = sbr.rel (0) target = $region17
    $region16: #{tpu_custom_call.1} parent=1 // pred_region
      %s39 = ssub.s32 512, 512
      %40 = vsyncadd [#allocation5], %s39
      %s41 = sshll.u32 [#allocation6], 4
      %s42 = int_to_ptr.vmem [resolvable:$true] %s41
      %47 = dma.hbm_to_vmem [thread:$0]  %s3, 512, %s42, [#allocation5], 64, 64, 4
    $region17: #{tpu_custom_call.1} parent=1 // pred_fallthru
      _
    // Predicated region
    $region18: #{tpu_custom_call.1} parent=1 // pred_check
      _
    $region19: #{tpu_custom_call.1} parent=1 // pred_check_branch
      %49 = sbr.rel (0) target = $region21
    $region20: #{tpu_custom_call.1} parent=1 // pred_region
      _
    $region21: #{tpu_custom_call.1} parent=1 // pred_fallthru
      _
    // Predicated region
    $region22: #{tpu_custom_call.1} parent=1 // pred_check
      _
    $region23: #{tpu_custom_call.1} parent=1 // pred_check_branch
      %51 = sbr.rel (0) target = $region25
    $region24: #{tpu_custom_call.1} parent=1 // pred_region
      %52 = dma.done [#allocation3], 128
    $region25: #{tpu_custom_call.1} parent=1 // pred_fallthru
      _
    // Predicated region
    $region26: #{tpu_custom_call.1} parent=1 // pred_check
      _
    $region27: #{tpu_custom_call.1} parent=1 // pred_check_branch
      %54 = sbr.rel (0) target = $region29
    $region28: #{tpu_custom_call.1} parent=1 // pred_region
      %55 = dma.done [#allocation5], 256
    $region29: #{tpu_custom_call.1} parent=1 // pred_fallthru
      _
    // Predicated region
    $region30: #{tpu_custom_call.1} parent=1 // pred_check
      _
    $region31: #{tpu_custom_call.1} parent=1 // pred_check_branch
      %57 = sbr.rel (0) target = $region33
    $region32: #{tpu_custom_call.1} parent=1 // pred_region
      %58 = dma.done [#allocation5], 512
    $region33: #{tpu_custom_call.1} parent=1 // pred_fallthru
      _
    %v60 = vld [vmem:[#allocation2] sm:$0xff]
    %v61 = vpack.c.bf16 %v60, %v60
    %v62 = vld [vmem:[#allocation4] sm:$0xf]
    %v63 = vld [vmem:[#allocation4 + $0x4] sm:$0xf]
    %v64 = vld [vmem:[#allocation4 + $0x8] sm:$0xf]
    %v65 = vld [vmem:[#allocation4 + $0xc] sm:$0xf]
    %v66 = vld [vmem:[%s2] sm:$0x1]
    %v68 = vlaneseq
    %v69 = vshrl.u32 %v68, 7
    %v70 = vsub.s32 0, %v69
    %v71 = vrot.slane %v66, %v70
    %v77 = vunpack.c.l.b16 %v62
    %v78 = vunpack.c.l.b16 %v63
    %v79 = vunpack.c.l.b16 %v64
    %v80 = vunpack.c.l.b16 %v65
    %v81 = vpack.c.b16 %v78, %v77
    %v82 = vpack.c.b16 %v80, %v79
    %vm85 = vcmask 261120
    %v87 = vsel %vm85, %v61, 0
    %89 = vmatprep.subr.bf16.mxu0 0
    %90 = vmatpush1.bf16.msra.mxu0 %v81
    %91 = vmatprep.subr.bf16.mxu0 0
    %92 = vmatpush1.bf16.msra.mxu0 %v82
    %93 = vmatprep.subr.bf16.mxu0 0
    %94 = vmatpush1.bf16.msra.mxu0 0
    %95 = vmatprep.subr.bf16.mxu0 0
    %96 = vmatpush1.bf16.msra.mxu0 0
    %97 = vmatprep.subr.bf16.mxu0 0
    %98 = vmatpush1.bf16.msra.mxu0 0
    %99 = vmatprep.subr.bf16.mxu0 0
    %100 = vmatpush1.bf16.msra.mxu0 0
    %101 = vmatprep.subr.bf16.mxu0 0
    %102 = vmatpush1.bf16.msra.mxu0 0
    %103 = vmatprep.subr.bf16.mxu0 0
    %104 = vmatpush1.bf16.msra.mxu0 0
    %105 = vmatprep.subr.bf16.mxu0 0
    %106 = vmatpush1.bf16.msra.mxu0 0
    %107 = vmatprep.subr.bf16.mxu0 0
    %108 = vmatpush1.bf16.msra.mxu0 0
    %109 = vmatprep.subr.bf16.mxu0 0
    %110 = vmatpush1.bf16.msra.mxu0 0
    %111 = vmatprep.subr.bf16.mxu0 0
    %112 = vmatpush1.bf16.msra.mxu0 0
    %113 = vmatprep.subr.bf16.mxu0 0
    %114 = vmatpush1.bf16.msra.mxu0 0
    %115 = vmatprep.subr.bf16.mxu0 0
    %116 = vmatpush1.bf16.msra.mxu0 0
    %117 = vmatprep.subr.bf16.mxu0 0
    %118 = vmatpush1.bf16.msra.mxu0 0
    %119 = vmatprep.subr.bf16.mxu0 0
    %120 = vmatpush1.bf16.msra.mxu0 0
    %121 = vmatprep.mubr.bf16.mxu0 0
    %122 = vmatmul.mubr.bf16.gmra.mrb[0].mxu0 %v87
    %v123 = vpop.f32.mrb[0].mxu0
    %v124 = vadd.f32 %v71, %v123
    %v125 = vpop.f32.mrb[0].mxu0
    %v126 = vpop.f32.mrb[0].mxu0
    %v127 = vpop.f32.mrb[0].mxu0
    %128 = vdwg.mxu0
    %v129 = vpack.c.bf16 %v124, %v124
    %v130 = vld [vmem:[#allocation6] sm:$0xf]
    %v131 = vld [vmem:[#allocation6 + $0x4] sm:$0xf]
    %v132 = vld [vmem:[#allocation6 + $0x8] sm:$0xf]
    %v133 = vld [vmem:[#allocation6 + $0xc] sm:$0xf]
    %v134 = vld [vmem:[#allocation6 + $0x10] sm:$0xf]
    %v135 = vld [vmem:[#allocation6 + $0x14] sm:$0xf]
    %v136 = vld [vmem:[#allocation6 + $0x18] sm:$0xf]
    %v137 = vld [vmem:[#allocation6 + $0x1c] sm:$0xf]
    %v138 = vld [vmem:[%s4] sm:$0x1]
    %v140 = vlaneseq
    %v141 = vshrl.u32 %v140, 7
    %v142 = vsub.s32 0, %v141
    %v143 = vrot.slane %v138, %v142
    %v153 = vunpack.c.l.b16 %v130
    %v154 = vunpack.c.l.b16 %v131
    %v155 = vunpack.c.l.b16 %v132
    %v156 = vunpack.c.l.b16 %v133
    %v157 = vunpack.c.l.b16 %v134
    %v158 = vunpack.c.l.b16 %v135
    %v159 = vunpack.c.l.b16 %v136
    %v160 = vunpack.c.l.b16 %v137
    %v161 = vpack.c.b16 %v154, %v153
    %v162 = vpack.c.b16 %v156, %v155
    %v163 = vpack.c.b16 %v158, %v157
    %v164 = vpack.c.b16 %v160, %v159
    %vm169 = vcmask 523264
    %v171 = vsel %vm169, %v129, 0
    %173 = vmatprep.subr.bf16.mxu0 0
    %174 = vmatpush1.bf16.msra.mxu0 %v161
    %175 = vmatprep.subr.bf16.mxu0 0
    %176 = vmatpush1.bf16.msra.mxu0 %v162
    %177 = vmatprep.subr.bf16.mxu0 0
    %178 = vmatpush1.bf16.msra.mxu0 %v163
    %179 = vmatprep.subr.bf16.mxu0 0
    %180 = vmatpush1.bf16.msra.mxu0 %v164
    %181 = vmatprep.subr.bf16.mxu0 0
    %182 = vmatpush1.bf16.msra.mxu0 0
    %183 = vmatprep.subr.bf16.mxu0 0
    %184 = vmatpush1.bf16.msra.mxu0 0
    %185 = vmatprep.subr.bf16.mxu0 0
    %186 = vmatpush1.bf16.msra.mxu0 0
    %187 = vmatprep.subr.bf16.mxu0 0
    %188 = vmatpush1.bf16.msra.mxu0 0
    %189 = vmatprep.subr.bf16.mxu0 0
    %190 = vmatpush1.bf16.msra.mxu0 0
    %191 = vmatprep.subr.bf16.mxu0 0
    %192 = vmatpush1.bf16.msra.mxu0 0
    %193 = vmatprep.subr.bf16.mxu0 0
    %194 = vmatpush1.bf16.msra.mxu0 0
    %195 = vmatprep.subr.bf16.mxu0 0
    %196 = vmatpush1.bf16.msra.mxu0 0
    %197 = vmatprep.subr.bf16.mxu0 0
    %198 = vmatpush1.bf16.msra.mxu0 0
    %199 = vmatprep.subr.bf16.mxu0 0
    %200 = vmatpush1.bf16.msra.mxu0 0
    %201 = vmatprep.subr.bf16.mxu0 0
    %202 = vmatpush1.bf16.msra.mxu0 0
    %203 = vmatprep.subr.bf16.mxu0 0
    %204 = vmatpush1.bf16.msra.mxu0 0
    %205 = vmatprep.mubr.bf16.mxu0 0
    %206 = vmatmul.mubr.bf16.gmra.mrb[0].mxu0 %v171
    %v207 = vpop.f32.mrb[0].mxu0
    %v208 = vadd.f32 %v143, %v207
    %v209 = vpop.f32.mrb[0].mxu0
    %v210 = vpop.f32.mrb[0].mxu0
    %v211 = vpop.f32.mrb[0].mxu0
    %212 = vdwg.mxu0
    %v213 = vsub.f32 0.0, %v208
    %v214 = vmul.f32 %v213, 1.442695
    %v215 = vpow.pop %v214
    %v216 = vadd.f32 %v215, 1.0
    %v217 = vrcp.pop %v216
    %vm218 = vcmask 7168
    %219 = vst.msk [vmem:[%s5] sm:$0xff] %vm218, %v217
    // Predicated region
    $region34: #{tpu_custom_call.1} parent=1 // pred_check
      _
    $region35: #{tpu_custom_call.1} parent=1 // pred_check_branch
      %221 = sbr.rel (0) target = $region37
    $region36: #{tpu_custom_call.1} parent=1 // pred_region
      _
    $region37: #{tpu_custom_call.1} parent=1 // pred_fallthru
      _
    // Predicated region
    $region38: #{tpu_custom_call.1} parent=1 // pred_check
      _
    $region39: #{tpu_custom_call.1} parent=1 // pred_check_branch
      %223 = sbr.rel (0) target = $region41
    $region40: #{tpu_custom_call.1} parent=1 // pred_region
      _
    $region41: #{tpu_custom_call.1} parent=1 // pred_fallthru
      _
    %224 = vsyncpa [#allocation3], 1
    %225 = vsyncpa [#allocation5], 1

</llo_original>
